<compile_context>
chip_gen: v7x
topology: tpu7x:2x2x1
jax: 0.10.0
libtpu: 0.0.40
codegen_flags: <defaults>
</compile_context>

<pallas_src>
import functools

import jax
import jax.numpy as jnp
from jax import lax
from jax.experimental import pallas as pl
from jax.experimental.pallas import tpu as pltpu

_LANES = 128            # vreg lane width
_SUBLANES = 8           # vreg sublane count (min f32 tile rows)
_BLOCK_ROWS = 4096      # rows per grid step in the two-pass path (2 MiB f32)
_ACC_ROWS = 512         # rows of the pass-1 VMEM min/max accumulators
_CHUNK_ROWS = 512       # rows per in-kernel chunk in the fused fast path
_NSPLIT = 2             # leading "parallel" axis of pass 1 (2 TCs on v7x)
_LARGE_PATH_VMEM = 32 * 1024 * 1024


def _cdiv(a, b):
    return -(-a // b)


def _out_dtype(dtype):
    # PyTorch true-divide promotes integer inputs to float.
    return dtype if jnp.issubdtype(dtype, jnp.floating) else jnp.float32


def _vmem_capacity_bytes():
    """Generation-aware VMEM capacity (128 MiB v5e/v6e, 64 MiB v7x)."""
    try:
        info = pltpu.get_tpu_info()
        cap = getattr(info, "vmem_capacity_bytes", None)
        if cap:
            return int(cap)
    except Exception:
        pass
    return 64 * 1024 * 1024   # conservative fallback (v7x-sized)


# ---------------------------------------------------------------------------
# Fast path: whole slab resident in VMEM, fused min/max + normalize.
# Chunked scan keeps live f32 temporaries to one (chunk, 128) tile.
# ---------------------------------------------------------------------------
def _fused_kernel(x_ref, o_ref, *, rows, chunk):
    nfull = rows // chunk
    tail = rows - nfull * chunk

    def _chunk_minmax(sl, mn, mx):
        xs = x_ref[sl, :].astype(jnp.float32)
        return jnp.minimum(mn, jnp.min(xs)), jnp.maximum(mx, jnp.max(xs))

    mn = jnp.float32(jnp.inf)
    mx = jnp.float32(-jnp.inf)
    if nfull > 0:
        def scan_body(i, carry):
            start = pl.multiple_of(i * chunk, chunk)
            return _chunk_minmax(pl.ds(start, chunk), carry[0], carry[1])
        mn, mx = lax.fori_loop(0, nfull, scan_body, (mn, mx))
    if tail > 0:
        mn, mx = _chunk_minmax(pl.ds(nfull * chunk, tail), mn, mx)

    inv = 1.0 / (mx - mn)   # exact scalar reciprocal, hoisted off the hot loop

    def _norm_chunk(sl):
        o_ref[sl, :] = ((x_ref[sl, :].astype(jnp.float32) - mn) * inv
                        ).astype(o_ref.dtype)

    if nfull > 0:
        def norm_body(i, carry):
            start = pl.multiple_of(i * chunk, chunk)
            _norm_chunk(pl.ds(start, chunk))
            return carry
        lax.fori_loop(0, nfull, norm_body, 0)
    if tail > 0:
        _norm_chunk(pl.ds(nfull * chunk, tail))


# ---------------------------------------------------------------------------
# Two-pass path, pass 1: per-core-split partial min/max reduction.
# ---------------------------------------------------------------------------
def _reduce_kernel(x_ref, mins_ref, maxs_ref, min_acc, max_acc, *,
                   valid_rows, block_rows, acc_rows, blocks_per_split,
                   needs_mask):
    k = pl.program_id(1)

    @pl.when(k == 0)
    def _():
        min_acc[...] = jnp.full_like(min_acc, jnp.inf)
        max_acc[...] = jnp.full_like(max_acc, -jnp.inf)

    # Global row-block index.  The input index_map clamps out-of-range blocks;
    # the mask below uses the UNCLAMPED index, so duplicated blocks are fully
    # masked to +/-inf and contribute nothing (min/max is idempotent anyway).
    gb = pl.program_id(0) * blocks_per_split + k

    folds = block_rows // acc_rows
    for f in range(folds):
        xs = x_ref[pl.ds(f * acc_rows, acc_rows), :].astype(jnp.float32)
        if needs_mask:
            row = (gb * block_rows + f * acc_rows
                   + lax.broadcasted_iota(jnp.int32, xs.shape, 0))
            ok = row < valid_rows
            xs_min = jnp.where(ok, xs, jnp.inf)
            xs_max = jnp.where(ok, xs, -jnp.inf)
        else:
            xs_min = xs
            xs_max = xs
        # Pure elementwise (VALU) accumulation into small VMEM accumulators.
        min_acc[...] = jnp.minimum(min_acc[...], xs_min)
        max_acc[...] = jnp.maximum(max_acc[...], xs_max)

    # One cross-lane/sublane reduce + tile store, only on this core's last step.
    @pl.when(k == pl.num_programs(1) - 1)
    def _():
        mins_ref[...] = jnp.broadcast_to(
            jnp.min(min_acc[...], keepdims=True), mins_ref.shape)
        maxs_ref[...] = jnp.broadcast_to(
            jnp.max(max_acc[...], keepdims=True), maxs_ref.shape)


# ---------------------------------------------------------------------------
# Two-pass path, pass 2: elementwise normalize; per-core partials via SMEM.
# ---------------------------------------------------------------------------
def _normalize_kernel(mins_ref, maxs_ref, x_ref, o_ref, *, nsplit):
    # Combine partials with a few scalar SMEM reads (replaces the previous
    # tiny inter-pass XLA ops entirely).
    mn = mins_ref[0, 0]
    mx = maxs_ref[0, 0]
    for c in range(1, nsplit):
        mn = jnp.minimum(mn, mins_ref[c * _SUBLANES, 0])
        mx = jnp.maximum(mx, maxs_ref[c * _SUBLANES, 0])
    inv = 1.0 / (mx - mn)
    o_ref[...] = ((x_ref[...].astype(jnp.float32) - mn) * inv).astype(o_ref.dtype)


# ---------------------------------------------------------------------------
# Driver on a lane-dense (rows, 128) slab.
# ---------------------------------------------------------------------------
def _minmax_norm_2d(x2d, out_dtype, *, block_rows=_BLOCK_ROWS,
                    force_two_pass=False):
    rows = x2d.shape[0]
    cap = _vmem_capacity_bytes()

    in_bytes = rows * _LANES * x2d.dtype.itemsize
    out_bytes = rows * _LANES * jnp.dtype(out_dtype).itemsize

    # Fused-path VMEM budget: ~75% of physical capacity, capped at 100 MiB.
    fused_limit = min((cap * 3) // 4, 100 * 1024 * 1024)
    fused_fits = in_bytes + out_bytes + (8 << 20) <= fused_limit

    if fused_fits and not force_two_pass:
        return pl.pallas_call(
            functools.partial(_fused_kernel, rows=rows, chunk=_CHUNK_ROWS),
            out_shape=jax.ShapeDtypeStruct((rows, _LANES), out_dtype),
            compiler_params=pltpu.CompilerParams(
                vmem_limit_bytes=fused_limit),
        )(x2d)

    # ---- large path: two pipelined passes --------------------------------
    num_blocks = _cdiv(rows, block_rows)
    bpc = _cdiv(num_blocks, _NSPLIT)          # row-blocks per core split
    acc_rows = min(_ACC_ROWS, block_rows)
    assert block_rows % acc_rows == 0 and block_rows % _SUBLANES == 0
    needs_mask = (rows % block_rows != 0) or (_NSPLIT * bpc != num_blocks)

    tile = (block_rows, _LANES)
    part_block = (_SUBLANES, _LANES)
    part_shape = (_NSPLIT * _SUBLANES, _LANES)

    def in_map(c, k):
        # Clamp so duplicated / out-of-range blocks re-read the last real
        # block; they are neutralized by the in-kernel mask.
        return (jnp.minimum(c * bpc + k, num_blocks - 1), 0)

    mins, maxs = pl.pallas_call(
        functools.partial(_reduce_kernel, valid_rows=rows,
                          block_rows=block_rows, acc_rows=acc_rows,
                          blocks_per_split=bpc, needs_mask=needs_mask),
        out_shape=(jax.ShapeDtypeStruct(part_shape, jnp.float32),
                   jax.ShapeDtypeStruct(part_shape, jnp.float32)),
        grid=(_NSPLIT, bpc),
        in_specs=[pl.BlockSpec(tile, in_map)],
        out_specs=(pl.BlockSpec(part_block, lambda c, k: (c, 0)),
                   pl.BlockSpec(part_block, lambda c, k: (c, 0))),
        scratch_shapes=[pltpu.VMEM((acc_rows, _LANES), jnp.float32),
                        pltpu.VMEM((acc_rows, _LANES), jnp.float32)],
        compiler_params=pltpu.CompilerParams(
            dimension_semantics=("parallel", "arbitrary"),
            vmem_limit_bytes=_LARGE_PATH_VMEM),
    )(x2d)

    out2d = pl.pallas_call(
        functools.partial(_normalize_kernel, nsplit=_NSPLIT),
        out_shape=jax.ShapeDtypeStruct((rows, _LANES), out_dtype),
        grid=(num_blocks,),
        in_specs=[pl.BlockSpec(memory_space=pltpu.MemorySpace.SMEM),
                  pl.BlockSpec(memory_space=pltpu.MemorySpace.SMEM),
                  pl.BlockSpec(tile, lambda i: (i, 0))],
        out_specs=pl.BlockSpec(tile, lambda i: (i, 0)),
        compiler_params=pltpu.CompilerParams(
            dimension_semantics=("parallel",),
            vmem_limit_bytes=_LARGE_PATH_VMEM),
    )(mins, maxs, x2d)
    return out2d


def minmax_norm(x):
    orig_shape = x.shape
    out_dtype = _out_dtype(x.dtype)

    flat = x.reshape(-1)                       # free for contiguous inputs
    n = flat.shape[0]
    if n == 0:
        return flat.astype(out_dtype).reshape(orig_shape)

    rem = n % _LANES
    if rem == 0:
        out2d = _minmax_norm_2d(flat.reshape(n // _LANES, _LANES), out_dtype)
        return out2d.reshape(orig_shape)

    if n < _LANES:
        # Fewer elements than one lane row: not worth a kernel launch.
        xf = flat.astype(jnp.float32)
        mn, mx = jnp.min(xf), jnp.max(xf)
        return ((xf - mn) / (mx - mn)).astype(out_dtype).reshape(orig_shape)

    # Ragged tail (< 128 elems): edge-pad to a lane multiple; the pad value is
    # a copy of an existing element, so it is min/max-neutral.
    # TODO(synk): avoid this O(N) pad/slice by masking the flat tail in-kernel
    #             and normalizing the <128-element remainder in the epilogue.
    padded = jnp.pad(flat, (0, _LANES - rem), mode="edge")
    out2d = _minmax_norm_2d(padded.reshape(-1, _LANES), out_dtype)
    return out2d.reshape(-1)[:n].reshape(orig_shape)


if __name__ == "__main__":
    def _ref(v):
        return (v - v.min()) / (v.max() - v.min())

    k0, k1, k2, k3 = jax.random.split(jax.random.PRNGKey(0), 4)

    # 1) Small NCHW input -> fused single-read fast path.
    x = jax.random.normal(k0, (2, 4, 16, 16), dtype=jnp.float32)
    y = jax.block_until_ready(minmax_norm(x))
    assert y.shape == x.shape and y.dtype == x.dtype
    assert jnp.allclose(y, _ref(x), atol=1e-6, rtol=1e-6)

    # 2) Moderate input -> fused path exercising the chunked in-kernel scan
    #    (rows = 1040: two full 512-row chunks plus a 16-row tail chunk).
    x_mid = jax.random.normal(k1, (2, 4, 128, 130), dtype=jnp.float32)
    y_mid = jax.block_until_ready(minmax_norm(x_mid))
    assert y_mid.shape == x_mid.shape and y_mid.dtype == x_mid.dtype
    assert jnp.allclose(y_mid, _ref(x_mid), atol=1e-6, rtol=1e-6)

    # 3) Same data forced down the two-pass large path with small blocks so
    #    the 2-way core split, block-index clamping, partial-block masking and
    #    the fused SMEM epilogue are all exercised without a huge test tensor.
    y_two = jax.block_until_ready(
        _minmax_norm_2d(x_mid.reshape(-1, _LANES), jnp.float32,
                        block_rows=256, force_two_pass=True)
    ).reshape(x_mid.shape)
    assert y_two.dtype == jnp.float32
    assert jnp.allclose(y_two, _ref(x_mid), atol=1e-6, rtol=1e-6)

    # 4) Ragged size (numel % 128 != 0) -> pad fallback path.
    x_rag = jax.random.normal(k2, (3, 50), dtype=jnp.float32)
    y_rag = jax.block_until_ready(minmax_norm(x_rag))
    assert y_rag.shape == x_rag.shape
    assert jnp.allclose(y_rag, _ref(x_rag), atol=1e-6, rtol=1e-6)

    # 5) Tiny (< 128 elements) -> pure-JAX path.
    x_tiny = jax.random.normal(k3, (5, 7), dtype=jnp.float32)
    y_tiny = jax.block_until_ready(minmax_norm(x_tiny))
    assert jnp.allclose(y_tiny, _ref(x_tiny), atol=1e-6, rtol=1e-6)

    print("KERNEL_OK")
</pallas_src>

<mosaic_0001>
module attributes {stable_mosaic.version = 11 : i64} {
  func.func @_fused_kernel(%arg0: memref<16x128xf32, #tpu.memory_space<vmem>>, %arg1: memref<16x128xf32, #tpu.memory_space<vmem>>) attributes {dimension_semantics = [], scalar_prefetch = 0 : i64, scratch_operands = 0 : i64, tpu.core_type = #tpu.core_type<tc>} {
    %c0 = arith.constant 0 : index
    %c0_0 = arith.constant 0 : index
    %0 = vector.load %arg0[%c0, %c0_0] : memref<16x128xf32, #tpu.memory_space<vmem>>, vector<16x128xf32>
    %1 = vector.shape_cast %0 : vector<16x128xf32> to vector<1x16x128xf32>
    %cst = arith.constant dense<0x7F800000> : vector<1xf32>
    %2 = vector.multi_reduction <minimumf>, %1, %cst [1, 2] : vector<1x16x128xf32> to vector<1xf32>
    %3 = vector.shape_cast %2 : vector<1xf32> to vector<1x1x1xf32>
    %4 = vector.extract %3[0, 0, 0] : f32 from vector<1x1x1xf32>
    %cst_1 = arith.constant 0x7F800000 : f32
    %5 = arith.minimumf %cst_1, %4 : f32
    %6 = vector.shape_cast %0 : vector<16x128xf32> to vector<1x16x128xf32>
    %cst_2 = arith.constant dense<0xFF800000> : vector<1xf32>
    %7 = vector.multi_reduction <maximumf>, %6, %cst_2 [1, 2] : vector<1x16x128xf32> to vector<1xf32>
    %8 = vector.shape_cast %7 : vector<1xf32> to vector<1x1x1xf32>
    %9 = vector.extract %8[0, 0, 0] : f32 from vector<1x1x1xf32>
    %cst_3 = arith.constant 0xFF800000 : f32
    %10 = arith.maximumf %cst_3, %9 : f32
    %11 = arith.subf %10, %5 : f32
    %cst_4 = arith.constant 1.000000e+00 : f32
    %12 = arith.divf %cst_4, %11 : f32
    %c0_5 = arith.constant 0 : index
    %c0_6 = arith.constant 0 : index
    %13 = vector.load %arg0[%c0_5, %c0_6] : memref<16x128xf32, #tpu.memory_space<vmem>>, vector<16x128xf32>
    %14 = vector.broadcast %5 : f32 to vector<16x128xf32>
    %15 = arith.subf %13, %14 : vector<16x128xf32>
    %16 = vector.broadcast %12 : f32 to vector<16x128xf32>
    %17 = arith.mulf %15, %16 : vector<16x128xf32>
    %c0_7 = arith.constant 0 : index
    %c0_8 = arith.constant 0 : index
    %18 = vector.load %arg1[%c0_7, %c0_8] : memref<16x128xf32, #tpu.memory_space<vmem>>, vector<16x128xf32>
    tpu.vector_store %arg1[%c0_7, %c0_8], %17 {strides = array<i32>} : memref<16x128xf32, #tpu.memory_space<vmem>>, vector<16x128xf32>,
    return
  }
}

</mosaic_0001>

<llo_original>
// kernel: tpu_custom_call.1
$region0: #{tpu_custom_call.1}
  #allocation0 [shape = 'u32[]', space=smem, size = 0x4, offset = 0x4, fixed_abs, tag = 'smem constant byte address 0x4 - core index']
  #allocation1 [shape = 'u32[144,128]{1,0:T(1,128)}', space=vmem, size = 0x12000, scoped, tag = 'internal scratch']
  %s0 = inlined_call_operand.hbm [shape: f32[16,128], index: 0, kind: input, shape index: {}]
  %s1 = inlined_call_operand.hbm [shape: f32[16,128], index: 1, kind: output, shape index: {}]
  %s2 = sld [smem:[#allocation0]]
  $region18: #{tpu_custom_call.1} parent=0
    _
  %s4 = ssub.s32 1, %s2
  %s5 = scalar_select 0, %s4, %s2
  $region1: #{tpu_custom_call.1} parent=0
    #allocation2 [shape = 'u8[8192]{0}', space=vmem, size = 0x2000, scoped, tag = 'input window, operand 0, single buffered']
    #allocation3 [shape = 's32[1]{0}', space=sflag, size = 0x4, scoped, tag = 'scoped memory for tpu_custom_call.1']
    #allocation4 [shape = 's32[1]{0}', space=sflag, size = 0x4, scoped, tag = 'scoped memory for tpu_custom_call.1']
    #allocation5 [shape = 'u8[8192]{0}', space=vmem, size = 0x2000, scoped, tag = 'output window, operand 0, single buffered']
    %6 = vsyncpa [#allocation3], 0
    %7 = vsyncpa [#allocation4], 0
    // Predicated region
    $region2: #{tpu_custom_call.1} parent=1 // pred_check
      _
    $region3: #{tpu_custom_call.1} parent=1 // pred_check_branch
      %9 = sbr.rel (0) target = $region5
    $region4: #{tpu_custom_call.1} parent=1 // pred_region
      %s11 = ssub.s32 256, 256
      %12 = vsyncadd [#allocation3], %s11
      %s13 = sshll.u32 [#allocation2], 4
      %s14 = int_to_ptr.vmem [resolvable:$true] %s13
      %19 = dma.hbm_to_vmem [thread:$0]  %s0, 256, %s14, [#allocation3], 128, 128, 8
    $region5: #{tpu_custom_call.1} parent=1 // pred_fallthru
      _
    // Predicated region
    $region6: #{tpu_custom_call.1} parent=1 // pred_check
      _
    $region7: #{tpu_custom_call.1} parent=1 // pred_check_branch
      %21 = sbr.rel (0) target = $region9
    $region8: #{tpu_custom_call.1} parent=1 // pred_region
      %22 = dma.done [#allocation3], 256
    $region9: #{tpu_custom_call.1} parent=1 // pred_fallthru
      _
    %v23 = vld [vmem:[#allocation2] sm:$0xff]
    %v24 = vld [vmem:[#allocation2 + $0x8] sm:$0xff]
    %v25 = vmin.f32 %v23, %v24
    %26 = vmin.xlane.f32.xlu0 %v25
    %v27 = vpop.xlane.xlu0 %26
    %v28 = vrot.slane %v27, 4
    %v29 = vmin.f32 %v27, %v28
    %v30 = vrot.slane %v29, 2
    %v31 = vmin.f32 %v29, %v30
    %v32 = vrot.slane %v31, 1
    %v33 = vmin.f32 %v31, %v32
    %s34 = vtos %v33
    %v35 = vmax.f32 %v23, %v24
    %36 = vmax.xlane.f32.xlu0 %v35
    %v37 = vpop.xlane.xlu0 %36
    %v38 = vrot.slane %v37, 4
    %v39 = vmax.f32 %v37, %v38
    %v40 = vrot.slane %v39, 2
    %v41 = vmax.f32 %v39, %v40
    %v42 = vrot.slane %v41, 1
    %v43 = vmax.f32 %v41, %v42
    %s44 = vtos %v43
    %s45 = ssub.f32 %s44, %s34
    %v46 = vstv %s45
    %v47 = vrcp.pop %v46
    %s48 = vtos %v47
    %v49 = vstv %s34
    %v50 = vsub.f32 %v23, %v49
    %v51 = vsub.f32 %v24, %v49
    %v52 = vstv %s48
    %v53 = vmul.f32 %v50, %v52
    %v54 = vmul.f32 %v51, %v52
    %55 = vst [vmem:[#allocation5] sm:$0xff] %v53
    %56 = vst [vmem:[#allocation5 + $0x8] sm:$0xff] %v54
    // Predicated region
    $region10: #{tpu_custom_call.1} parent=1 // pred_check
      _
    $region11: #{tpu_custom_call.1} parent=1 // pred_check_branch
      %58 = sbr.rel (0) target = $region13
    $region12: #{tpu_custom_call.1} parent=1 // pred_region
      %s60 = ssub.s32 256, 256
      %61 = vsyncadd [#allocation4], %s60
      %s62 = sshll.u32 [#allocation5], 4
      %s63 = int_to_ptr.vmem [resolvable:$true] %s62
      %68 = dma.vmem_to_hbm [thread:$0]  %s63, 256, %s1, [#allocation4], 128, 128, 8
    $region13: #{tpu_custom_call.1} parent=1 // pred_fallthru
      _
    // Predicated region
    $region14: #{tpu_custom_call.1} parent=1 // pred_check
      _
    $region15: #{tpu_custom_call.1} parent=1 // pred_check_branch
      %70 = sbr.rel (0) target = $region17
    $region16: #{tpu_custom_call.1} parent=1 // pred_region
      %71 = dma.done [#allocation4], 256
    $region17: #{tpu_custom_call.1} parent=1 // pred_fallthru
      _
    %72 = vsyncpa [#allocation3], 1
    %73 = vsyncpa [#allocation4], 1

</llo_original>
